<compile_context>
chip_gen: v7x
topology: tpu7x:2x2x1
jax: 0.10.0
libtpu: 0.0.40
codegen_flags: <defaults>
</compile_context>

<pallas_src>
import jax
import jax.numpy as jnp
from jax.experimental import pallas as pl
from jax.experimental.pallas import tpu as pltpu

IN_F = 4      # fc1 in_features
OUT_F = 2     # fc3 out_features
LANE = 128    # TPU lane width
MAX_TB = 512  # max batch-tile width (lanes per grid step)


def fused_linear_kernel(w_smem, xT_ref, oT_ref):
    """out_T[n, :] = sum_k Wf[k, n] * x_T[k, :]  (VPU scalar x lane-vector FMAs).

    w_smem : (IN_F, OUT_F) f32 in SMEM   (scalar reads)
    xT_ref : (IN_F, TB)    batch on lanes
    oT_ref : (OUT_F, TB)   lane-dense output tile
    """
    xT = xT_ref[...].astype(jnp.float32)            # (IN_F, TB), f32 accumulate
    for n in range(OUT_F):                           # unrolled at trace time
        acc = w_smem[0, n] * xT[0:1, :]
        for k in range(1, IN_F):
            acc = acc + w_smem[k, n] * xT[k:k + 1, :]
        oT_ref[n:n + 1, :] = acc.astype(oT_ref.dtype)


def fuse_weights(w1, w2, w3):
    """One-time algebraic fusion: x@W1.T@W2.T@W3.T == x @ (W1.T@W2.T@W3.T)."""
    return (w1.T @ w2.T @ w3.T).astype(jnp.float32)  # (IN_F, OUT_F)


@jax.jit
def mymodel_forward(x, w_fused):
    """x: (B, IN_F); w_fused: (IN_F, OUT_F).  Returns (B, OUT_F)."""
    B = x.shape[0]
    # Pad batch to a lane-dense multiple of the tile so every store is an
    # unmasked full-lane vst; zero padding is sliced off afterwards.
    b_pad = ((max(B, LANE) + LANE - 1) // LANE) * LANE
    tb = min(MAX_TB, b_pad)
    b_pad = ((b_pad + tb - 1) // tb) * tb

    xT = x.T                                          # (IN_F, B)
    if b_pad != B:
        xT = jnp.pad(xT, ((0, 0), (0, b_pad - B)))

    oT = pl.pallas_call(
        fused_linear_kernel,
        out_shape=jax.ShapeDtypeStruct((OUT_F, b_pad), x.dtype),
        grid=(b_pad // tb,),
        in_specs=[
            # 8 scalars -> SMEM, read scalarly inside the kernel.
            pl.BlockSpec(memory_space=pltpu.MemorySpace.SMEM),
            pl.BlockSpec((IN_F, tb), lambda i: (0, i)),
        ],
        out_specs=pl.BlockSpec((OUT_F, tb), lambda i: (0, i)),
        compiler_params=pltpu.CompilerParams(
            dimension_semantics=("parallel",),        # megacore split on v7x
            vmem_limit_bytes=32 * 1024 * 1024,        # tiles use <64 KiB; safe on v7x
        ),
    )(w_fused, xT)

    return oT[:, :B].T                                # (B, OUT_F)


if __name__ == "__main__":
    key = jax.random.PRNGKey(0)
    kx, k1, k2, k3 = jax.random.split(key, 4)

    B = 2
    x = jax.random.normal(kx, (B, IN_F), dtype=jnp.float32)

    # Deterministic parameter init (Kaiming-uniform-like bounds as nn.Linear).
    def init_w(k, out_f, in_f):
        bound = 1.0 / jnp.sqrt(in_f)
        return jax.random.uniform(k, (out_f, in_f), jnp.float32, -bound, bound)

    w1 = init_w(k1, 6, 4)   # fc1.weight
    w2 = init_w(k2, 8, 6)   # fc2.weight
    w3 = init_w(k3, 2, 8)   # fc3.weight

    # Hoisted, one-time fusion (the "init" step); reused by every forward call.
    w_fused = jax.block_until_ready(fuse_weights(w1, w2, w3))

    y = mymodel_forward(x, w_fused)
    jax.block_until_ready(y)

    # Reference in plain JAX (same math as the PyTorch forward).
    # Weight fusion changes f32 rounding order slightly; well within tol.
    y_ref = x @ w1.T @ w2.T @ w3.T
    assert y.shape == (B, OUT_F)
    assert jnp.allclose(y, y_ref, atol=1e-5, rtol=1e-5)

    print("KERNEL_OK")
</pallas_src>

<mosaic_0001>
module attributes {stable_mosaic.version = 11 : i64} {
  func.func @fused_linear_kernel(%arg0: i32, %arg1: memref<4x2xf32, #tpu.memory_space<smem>>, %arg2: memref<4x128xf32, #tpu.memory_space<vmem>>, %arg3: memref<2x128xf32, #tpu.memory_space<vmem>>) attributes {dimension_semantics = [#tpu.dimension_semantics<parallel>], iteration_bounds = array<i64: 1>, scalar_prefetch = 0 : i64, scratch_operands = 0 : i64, tpu.core_type = #tpu.core_type<tc>, window_params = [{transform_indices = @transform_0, window_bounds = array<i64: 4, 2>}, {transform_indices = @transform_1, window_bounds = array<i64: 4, 128>}, {transform_indices = @transform_2, window_bounds = array<i64: 2, 128>}]} {
    %c0 = arith.constant 0 : index
    %c0_0 = arith.constant 0 : index
    %0 = vector.load %arg2[%c0, %c0_0] : memref<4x128xf32, #tpu.memory_space<vmem>>, vector<4x128xf32>
    %c0_1 = arith.constant 0 : index
    %c0_2 = arith.constant 0 : index
    %1 = memref.load %arg1[%c0_1, %c0_2] : memref<4x2xf32, #tpu.memory_space<smem>>
    %2 = vector.extract_strided_slice %0 {offsets = [0, 0], sizes = [1, 128], strides = [1, 1]} : vector<4x128xf32> to vector<1x128xf32>
    %3 = vector.broadcast %1 : f32 to vector<1x128xf32>
    %4 = arith.mulf %3, %2 : vector<1x128xf32>
    %c1 = arith.constant 1 : index
    %c0_3 = arith.constant 0 : index
    %5 = memref.load %arg1[%c1, %c0_3] : memref<4x2xf32, #tpu.memory_space<smem>>
    %6 = vector.extract_strided_slice %0 {offsets = [1, 0], sizes = [1, 128], strides = [1, 1]} : vector<4x128xf32> to vector<1x128xf32>
    %7 = vector.broadcast %5 : f32 to vector<1x128xf32>
    %8 = arith.mulf %7, %6 : vector<1x128xf32>
    %9 = arith.addf %4, %8 : vector<1x128xf32>
    %c2 = arith.constant 2 : index
    %c0_4 = arith.constant 0 : index
    %10 = memref.load %arg1[%c2, %c0_4] : memref<4x2xf32, #tpu.memory_space<smem>>
    %11 = vector.extract_strided_slice %0 {offsets = [2, 0], sizes = [1, 128], strides = [1, 1]} : vector<4x128xf32> to vector<1x128xf32>
    %12 = vector.broadcast %10 : f32 to vector<1x128xf32>
    %13 = arith.mulf %12, %11 : vector<1x128xf32>
    %14 = arith.addf %9, %13 : vector<1x128xf32>
    %c3 = arith.constant 3 : index
    %c0_5 = arith.constant 0 : index
    %15 = memref.load %arg1[%c3, %c0_5] : memref<4x2xf32, #tpu.memory_space<smem>>
    %16 = vector.extract_strided_slice %0 {offsets = [3, 0], sizes = [1, 128], strides = [1, 1]} : vector<4x128xf32> to vector<1x128xf32>
    %17 = vector.broadcast %15 : f32 to vector<1x128xf32>
    %18 = arith.mulf %17, %16 : vector<1x128xf32>
    %19 = arith.addf %14, %18 : vector<1x128xf32>
    %c0_6 = arith.constant 0 : index
    %c0_7 = arith.constant 0 : index
    %20 = vector.load %arg3[%c0_6, %c0_7] : memref<2x128xf32, #tpu.memory_space<vmem>>, vector<1x128xf32>
    tpu.vector_store %arg3[%c0_6, %c0_7], %19 {strides = array<i32>} : memref<2x128xf32, #tpu.memory_space<vmem>>, vector<1x128xf32>,
    %c0_8 = arith.constant 0 : index
    %c1_9 = arith.constant 1 : index
    %21 = memref.load %arg1[%c0_8, %c1_9] : memref<4x2xf32, #tpu.memory_space<smem>>
    %22 = vector.extract_strided_slice %0 {offsets = [0, 0], sizes = [1, 128], strides = [1, 1]} : vector<4x128xf32> to vector<1x128xf32>
    %23 = vector.broadcast %21 : f32 to vector<1x128xf32>
    %24 = arith.mulf %23, %22 : vector<1x128xf32>
    %c1_10 = arith.constant 1 : index
    %c1_11 = arith.constant 1 : index
    %25 = memref.load %arg1[%c1_10, %c1_11] : memref<4x2xf32, #tpu.memory_space<smem>>
    %26 = vector.extract_strided_slice %0 {offsets = [1, 0], sizes = [1, 128], strides = [1, 1]} : vector<4x128xf32> to vector<1x128xf32>
    %27 = vector.broadcast %25 : f32 to vector<1x128xf32>
    %28 = arith.mulf %27, %26 : vector<1x128xf32>
    %29 = arith.addf %24, %28 : vector<1x128xf32>
    %c2_12 = arith.constant 2 : index
    %c1_13 = arith.constant 1 : index
    %30 = memref.load %arg1[%c2_12, %c1_13] : memref<4x2xf32, #tpu.memory_space<smem>>
    %31 = vector.extract_strided_slice %0 {offsets = [2, 0], sizes = [1, 128], strides = [1, 1]} : vector<4x128xf32> to vector<1x128xf32>
    %32 = vector.broadcast %30 : f32 to vector<1x128xf32>
    %33 = arith.mulf %32, %31 : vector<1x128xf32>
    %34 = arith.addf %29, %33 : vector<1x128xf32>
    %c3_14 = arith.constant 3 : index
    %c1_15 = arith.constant 1 : index
    %35 = memref.load %arg1[%c3_14, %c1_15] : memref<4x2xf32, #tpu.memory_space<smem>>
    %36 = vector.extract_strided_slice %0 {offsets = [3, 0], sizes = [1, 128], strides = [1, 1]} : vector<4x128xf32> to vector<1x128xf32>
    %37 = vector.broadcast %35 : f32 to vector<1x128xf32>
    %38 = arith.mulf %37, %36 : vector<1x128xf32>
    %39 = arith.addf %34, %38 : vector<1x128xf32>
    %c1_16 = arith.constant 1 : index
    %c0_17 = arith.constant 0 : index
    %40 = vector.load %arg3[%c1_16, %c0_17] : memref<2x128xf32, #tpu.memory_space<vmem>>, vector<1x128xf32>
    tpu.vector_store %arg3[%c1_16, %c0_17], %39 {strides = array<i32>} : memref<2x128xf32, #tpu.memory_space<vmem>>, vector<1x128xf32>,
    return
  }
  func.func @transform_0(%arg0: i32) -> (i32, i32) {
    %c0_i32 = arith.constant 0 : i32
    %c0_i32_0 = arith.constant 0 : i32
    %c0_i32_1 = arith.constant 0 : i32
    return %c0_i32, %c0_i32_0 : i32, i32
  }
  func.func @transform_1(%arg0: i32) -> (i32, i32) {
    %c0_i32 = arith.constant 0 : i32
    %c0_i32_0 = arith.constant 0 : i32
    return %c0_i32, %arg0 : i32, i32
  }
  func.func @transform_2(%arg0: i32) -> (i32, i32) {
    %c0_i32 = arith.constant 0 : i32
    %c0_i32_0 = arith.constant 0 : i32
    return %c0_i32, %arg0 : i32, i32
  }
}

</mosaic_0001>

<llo_original>
// kernel: mymodel_forward.1
$region0: #{mymodel_forward.1}
  #allocation0 [shape = 'u32[]', space=smem, size = 0x4, offset = 0x4, fixed_abs, tag = 'smem constant byte address 0x4 - core index']
  #allocation1 [shape = 'u32[144,128]{1,0:T(1,128)}', space=vmem, size = 0x12000, scoped, tag = 'internal scratch']
  %s0 = inlined_call_operand.vmem [shape: f32[4,2], index: 0, kind: input, shape index: {}]
  %s1 = inlined_call_operand.vmem [shape: f32[4,128], index: 1, kind: input, shape index: {}]
  %s2 = inlined_call_operand.vmem [shape: f32[2,128], index: 2, kind: output, shape index: {}]
  %s3 = sld [smem:[#allocation0]]
  $region22: #{mymodel_forward.1} parent=0
    _
  %s5 = ssub.s32 1, %s3
  %s6 = scalar_select 0, %s5, %s3
  $region1: #{mymodel_forward.1} parent=0
    #allocation2 [shape = 'u8[2048]{0}', space=smem, size = 0x800, scoped, tag = 'input window, operand 0, single buffered']
    #allocation3 [shape = 's32[1]{0}', space=sflag, size = 0x4, scoped, tag = 'scoped memory for mymodel_forward.1']
    %7 = vsyncpa [#allocation3], 0
    // Predicated region
    $region2: #{mymodel_forward.1} parent=1 // pred_check
      _
    $region3: #{mymodel_forward.1} parent=1 // pred_check_branch
      %9 = sbr.rel (0) target = $region5
    $region4: #{mymodel_forward.1} parent=1 // pred_region
      %s11 = ssub.s32 64, 64
      %12 = vsyncadd [#allocation3], %s11
      %s14 = sshll.u32 %s0, 4
      %s15 = int_to_ptr.vmem [resolvable:$true] %s14
      %17 = dma.vmem_to_smem %s15, 64, [#allocation2], [#allocation3]
    $region5: #{mymodel_forward.1} parent=1 // pred_fallthru
      _
    // Predicated region
    $region6: #{mymodel_forward.1} parent=1 // pred_check
      _
    $region7: #{mymodel_forward.1} parent=1 // pred_check_branch
      %19 = sbr.rel (0) target = $region9
    $region8: #{mymodel_forward.1} parent=1 // pred_region
      _
    $region9: #{mymodel_forward.1} parent=1 // pred_fallthru
      _
    // Predicated region
    $region10: #{mymodel_forward.1} parent=1 // pred_check
      _
    $region11: #{mymodel_forward.1} parent=1 // pred_check_branch
      %21 = sbr.rel (0) target = $region13
    $region12: #{mymodel_forward.1} parent=1 // pred_region
      %22 = dma.done [#allocation3], 64
    $region13: #{mymodel_forward.1} parent=1 // pred_fallthru
      _
    %23 = sfence
    %v24 = vld [vmem:[%s1] sm:$0xf]
    %s25 = sld [smem:[#allocation2]]
    %v26 = vstv %s25
    %v27 = vmul.f32 %v26, %v24
    %s28 = sld [smem:[#allocation2 + $0x80]]
    %v29 = vstv %s28
    %v30 = vmul.f32 %v29, %v24
    %v32 = vrot.slane %v30, 1
    %v34 = vadd.f32 %v27, %v32
    %s35 = sld [smem:[#allocation2 + $0x100]]
    %v36 = vstv %s35
    %v37 = vmul.f32 %v36, %v24
    %v39 = vrot.slane %v37, 2
    %v41 = vadd.f32 %v34, %v39
    %s42 = sld [smem:[#allocation2 + $0x180]]
    %v43 = vstv %s42
    %v44 = vmul.f32 %v43, %v24
    %v46 = vrot.slane %v44, 3
    %v48 = vadd.f32 %v41, %v46
    %49 = vst [vmem:[%s2] sm:$0x1] %v48
    %s50 = sld [smem:[#allocation2 + $0x1]]
    %v51 = vstv %s50
    %v52 = vmul.f32 %v51, %v24
    %s53 = sld [smem:[#allocation2 + $0x81]]
    %v54 = vstv %s53
    %v55 = vmul.f32 %v54, %v24
    %v57 = vrot.slane %v55, 1
    %v59 = vadd.f32 %v52, %v57
    %s60 = sld [smem:[#allocation2 + $0x101]]
    %v61 = vstv %s60
    %v62 = vmul.f32 %v61, %v24
    %v64 = vrot.slane %v62, 2
    %v66 = vadd.f32 %v59, %v64
    %s67 = sld [smem:[#allocation2 + $0x181]]
    %v68 = vstv %s67
    %v69 = vmul.f32 %v68, %v24
    %v71 = vrot.slane %v69, 3
    %v73 = vadd.f32 %v66, %v71
    %74 = vst [vmem:[%s2 + $0x1] sm:$0x1] %v73
    // Predicated region
    $region14: #{mymodel_forward.1} parent=1 // pred_check
      _
    $region15: #{mymodel_forward.1} parent=1 // pred_check_branch
      %76 = sbr.rel (0) target = $region17
    $region16: #{mymodel_forward.1} parent=1 // pred_region
      _
    $region17: #{mymodel_forward.1} parent=1 // pred_fallthru
      _
    // Predicated region
    $region18: #{mymodel_forward.1} parent=1 // pred_check
      _
    $region19: #{mymodel_forward.1} parent=1 // pred_check_branch
      %78 = sbr.rel (0) target = $region21
    $region20: #{mymodel_forward.1} parent=1 // pred_region
      _
    $region21: #{mymodel_forward.1} parent=1 // pred_fallthru
      _
    %79 = vsyncpa [#allocation3], 1

</llo_original>
